<compile_context>
chip_gen: v6e
topology: v6e:2x2x1
jax: 0.10.0
libtpu: 0.0.40
codegen_flags: <defaults>
</compile_context>

<pallas_src>
import jax
import jax.numpy as jnp
from jax.experimental import pallas as pl
from jax.experimental.pallas import tpu as pltpu


def _round_up(x, m):
    return ((x + m - 1) // m) * m


# --------------------------------------------------------------------------- #
# Kernels
# --------------------------------------------------------------------------- #
def _dash_actr_accumulate(w_ref, out_ref, acc_ref, r, t):
    """Shared body.  r, t: [seq_tile, lane_tile] f32, lane-aligned with each other."""
    seq_idx = pl.program_id(1)

    @pl.when(seq_idx == 0)
    def _init():
        acc_ref[...] = jnp.zeros_like(acc_ref)

    neg_w1 = -w_ref[1]
    w2 = w_ref[2]
    w3 = w_ref[3]

    # where(clamp_min(t,0.1) == 0.1, 0, t**(-w1)) == where(t > 0.1, exp(-w1*log t), 0):
    # the clamp only existed so the == 0.1 test catches t <= 0.1, and the
    # inf/NaN log() produces on the masked branch is discarded by the select.
    decay = jnp.where(t > 0.1, jnp.exp(neg_w1 * jnp.log(t)), 0.0)
    strength = jnp.where(r == 0.0, w2, w3)
    term = decay * strength                              # [seq_tile, lane_tile]

    # Fold the seq_tile rows onto 8 sublanes with pure inter-vreg VPU adds
    # (static, aligned slices); the single cross-sublane (XLU) collapse happens
    # once, in the finalize branch.
    st = term.shape[0]
    part = term[0:8, :]
    for off in range(8, st, 8):
        part = part + term[off:off + 8, :]
    acc_ref[...] += part

    @pl.when(seq_idx == pl.num_programs(1) - 1)
    def _finalize():
        s = jnp.maximum(jnp.sum(acc_ref[...], axis=0, keepdims=True), 0.0)
        out_ref[...] = jax.nn.sigmoid(w_ref[0] * jnp.log(1.0 + s) + w_ref[4])


def _dash_actr_kernel_packed(w_ref, x_ref, out_ref, acc_ref):
    # Lanes are interleaved [r0, t0, r1, t1, ...] (free view of [seq, batch, 2]).
    # roll(+1) puts each pair's r onto its t lane; lane tiles are even and start
    # at even global lanes, so a pair never straddles a block boundary and the
    # wrap-around value landing on lane 0 sits in a discarded r slot.
    x = x_ref[...].astype(jnp.float32)
    r_aligned = pltpu.roll(x, shift=1, axis=1)
    _dash_actr_accumulate(w_ref, out_ref, acc_ref, r_aligned, x)


def _dash_actr_kernel_split(w_ref, r_ref, t_ref, out_ref, acc_ref):
    # De-junked path: exp/log only touch real t values (half the EUP work of
    # the packed kernel per HBM byte).
    _dash_actr_accumulate(w_ref, out_ref, acc_ref,
                          r_ref[...].astype(jnp.float32),
                          t_ref[...].astype(jnp.float32))


# --------------------------------------------------------------------------- #
# Tiling
# --------------------------------------------------------------------------- #
_LANE_TILE_MAX = 1024   # 512 x 1024 f32 block = 2 MiB; double-buffered x2 inputs ~8 MiB
_SEQ_TILE_MAX = 512


def _pick_lane_tile(lanes_p):
    """Largest multiple-of-256 tile dividing lanes_p, keeping >= 2 lane tiles
    (so dimension_semantics='parallel' can shard across v7x's two TensorCores)
    and preferring an even tile count (balanced split)."""
    best, best_key = 256, None
    for t in range(256, min(_LANE_TILE_MAX, lanes_p) + 1, 256):
        if lanes_p % t:
            continue
        n = lanes_p // t
        if n < 2 and lanes_p > 256:
            continue
        key = (n % 2 == 0, t)            # prefer even tile count, then bigger tile
        if best_key is None or key > best_key:
            best_key, best = key, t
    return best


def _pick_seq_tile(seq, sub_align):
    """Seq (reduction) tile + padded seq length.  Large tiles amortize the
    ~0.35us/grid-step cost (mem-bound kernels only reach ~85% of the HBM
    roofline at >=512-row blocks); padding waste is capped at ~12.5%."""
    for cand in (_SEQ_TILE_MAX, 256, 128, 64, 32, 16, 8):
        if cand % sub_align:
            continue
        padded = _round_up(seq, cand)
        if (padded - seq) * 8 <= max(seq, 1):
            return cand, padded
    cand = max(sub_align, 8)
    return cand, _round_up(seq, cand)


def _plan_tiles(seq, lanes, itemsize, sub_align, lane_tile, seq_tile, n_inputs):
    """Returns (seq_p, lanes_p, seq_tile, lane_tile).  Pads on the host instead
    of falling back to full-axis blocks (prevents VMEM blow-ups, keeps stores
    lane-dense)."""
    lanes_p = _round_up(lanes, lane_tile if lane_tile is not None else 256)
    tiny = n_inputs * seq * lanes_p * itemsize <= (1 << 20)
    if lane_tile is None and seq_tile is None and tiny:
        # Single-block, grid-free dispatch: at these sizes per-step grid / DMA
        # setup overhead dominates and one block trivially fits VMEM.
        seq_p = _round_up(seq, max(sub_align, 8))
        return seq_p, lanes_p, seq_p, lanes_p
    if seq_tile is None:
        seq_tile, seq_p = _pick_seq_tile(seq, max(sub_align, 8))
    else:
        seq_p = _round_up(seq, seq_tile)
    if lane_tile is None:
        lane_tile = _pick_lane_tile(lanes_p)
    assert lane_tile % 128 == 0, "lane tile must stay lane-dense (multiple of 128)"
    assert seq_tile % 8 == 0 and seq_tile % sub_align == 0
    assert lanes_p % lane_tile == 0 and seq_p % seq_tile == 0
    return seq_p, lanes_p, seq_tile, lane_tile


# --------------------------------------------------------------------------- #
# pallas_call plumbing
# --------------------------------------------------------------------------- #
def _run_pallas(kernel, w, tiled_inputs, lanes_p, seq_p, lane_tile, seq_tile):
    grid = (lanes_p // lane_tile, seq_p // seq_tile)   # reduction (seq) axis last
    in_specs = [pl.BlockSpec(memory_space=pltpu.MemorySpace.SMEM)] + [
        pl.BlockSpec((seq_tile, lane_tile), lambda bi, si: (si, bi))
        for _ in tiled_inputs
    ]
    bytes_accessed = (sum(int(a.size) * a.dtype.itemsize for a in tiled_inputs)
                      + lanes_p * 4 + int(w.size) * 4)
    out = pl.pallas_call(
        kernel,
        out_shape=jax.ShapeDtypeStruct((1, lanes_p), jnp.float32),
        grid=grid,
        in_specs=in_specs,
        out_specs=pl.BlockSpec((1, lane_tile), lambda bi, si: (0, bi)),
        scratch_shapes=[pltpu.VMEM((8, lane_tile), jnp.float32)],
        compiler_params=pltpu.CompilerParams(
            dimension_semantics=("parallel", "arbitrary"),
            vmem_limit_bytes=32 * 1024 * 1024,
        ),
        # TODO(synk): if a profile shows exposed DMA after bf16 ingest, add
        # pipeline_mode=pl.Buffered(3) to the large input BlockSpecs.
        cost_estimate=pl.CostEstimate(
            flops=int(6 * seq_p * lanes_p),
            transcendentals=int(2 * seq_p * lanes_p),  # 2 EUP ops per processed lane-elem
            bytes_accessed=int(bytes_accessed),
        ),
    )(w, *tiled_inputs)
    return out[0]


def dash_actr_forward(w, inputs, *, ingest_dtype=None, lane_tile=None, seq_tile=None,
                      deinterleave=False):
    """DASH-ACTR forward.  inputs: [seq, batch, 2] with (r, t); returns [batch] f32.

    ingest_dtype=jnp.bfloat16 halves HBM bytes (slightly perturbs the t<=0.1
    boundary and adds ~0.4% relative error on t**(-w1)).  deinterleave=True
    routes through the split-input kernel (half the EUP work, one extra XLA
    pass over the data) -- use it where the kernel is not HBM-bound (v7x), or
    call dash_actr_forward_split directly when r/t already live separately.
    """
    w = jnp.asarray(w, jnp.float32)
    seq, batch, two = inputs.shape
    assert two == 2
    if deinterleave:
        return dash_actr_forward_split(w, inputs[..., 0], inputs[..., 1],
                                       ingest_dtype=ingest_dtype,
                                       lane_tile=lane_tile, seq_tile=seq_tile)

    dt = jnp.float32 if ingest_dtype is None else ingest_dtype
    x = inputs.reshape(seq, 2 * batch).astype(dt)   # free view; lanes = r,t,r,t,...
    sub_align = 16 if x.dtype == jnp.bfloat16 else 8
    lanes = 2 * batch
    seq_p, lanes_p, seq_tile, lane_tile = _plan_tiles(
        seq, lanes, x.dtype.itemsize, sub_align, lane_tile, seq_tile, n_inputs=1)
    assert lane_tile % 2 == 0   # (r, t) pairs never straddle a lane-tile boundary
    if (seq_p, lanes_p) != (seq, lanes):
        x = jnp.pad(x, ((0, seq_p - seq), (0, lanes_p - lanes)))   # zeros -> zero terms

    out = _run_pallas(_dash_actr_kernel_packed, w, [x], lanes_p, seq_p,
                      lane_tile, seq_tile)
    # Valid results live at odd lanes (the t slot of each (r, t) pair).
    return out[:lanes].reshape(batch, 2)[:, 1]


def dash_actr_forward_split(w, r, t, *, ingest_dtype=None, lane_tile=None, seq_tile=None):
    """De-junked path: r, t as separate [seq, batch] arrays (same total HBM
    bytes as the packed layout, half the transcendental work)."""
    w = jnp.asarray(w, jnp.float32)
    assert r.shape == t.shape and r.ndim == 2
    seq, batch = t.shape
    dt = jnp.float32 if ingest_dtype is None else ingest_dtype
    r = r.astype(dt)
    t = t.astype(dt)
    sub_align = 16 if t.dtype == jnp.bfloat16 else 8
    seq_p, lanes_p, seq_tile, lane_tile = _plan_tiles(
        seq, batch, t.dtype.itemsize, sub_align, lane_tile, seq_tile, n_inputs=2)
    if (seq_p, lanes_p) != (seq, batch):
        pad = ((0, seq_p - seq), (0, lanes_p - batch))
        r = jnp.pad(r, pad)
        t = jnp.pad(t, pad)                                   # t = 0 -> zero terms

    out = _run_pallas(_dash_actr_kernel_split, w, [r, t], lanes_p, seq_p,
                      lane_tile, seq_tile)
    return out[:batch]


def dash_actr_reference(w, inputs):
    """Pure-JAX reference mirroring the PyTorch forward."""
    r = inputs[:, :, 0]
    t = jnp.maximum(inputs[:, :, 1], 0.1)
    term = jnp.where(t == 0.1, 0.0, t ** (-w[1])) * jnp.where(r == 0.0, w[2], w[3])
    s = jnp.maximum(jnp.sum(term, axis=0), 0.0)
    return jax.nn.sigmoid(w[0] * jnp.log(1.0 + s) + w[4])


if __name__ == "__main__":
    # Deterministic parameters (module's init_w).
    w = jnp.array([1.4164, 0.516, -0.0564, 1.9223, 1.0549], dtype=jnp.float32)

    # Small example: seq_len=32, batch=384, last dim = (r, t).
    seq_len, batch = 32, 384
    key = jax.random.PRNGKey(0)
    kr, kt = jax.random.split(key)
    r = jax.random.bernoulli(kr, p=0.7, shape=(seq_len, batch)).astype(jnp.float32)
    t = jax.random.uniform(kt, (seq_len, batch), minval=0.0, maxval=10.0)
    inputs = jnp.stack([r, t], axis=-1)              # [seq, batch, 2]

    ref = dash_actr_reference(w, inputs)

    # 1) Packed layout, tiny-problem single-block dispatch (default at this size).
    out = dash_actr_forward(w, inputs)
    jax.block_until_ready(out)
    assert out.shape == (batch,)
    assert jnp.allclose(out, ref, atol=1e-5, rtol=1e-5)

    # 2) Packed layout, forced multi-tile grid (3 lane tiles x 4 seq tiles) to
    #    exercise the parallel lane axis and the seq-reduction accumulator.
    out_tiled = dash_actr_forward(w, inputs, lane_tile=256, seq_tile=8)
    jax.block_until_ready(out_tiled)
    assert jnp.allclose(out_tiled, ref, atol=1e-5, rtol=1e-5)

    # 3) Split r/t path (de-junked EUP kernel) via the deinterleave routing.
    out_split = dash_actr_forward(w, inputs, deinterleave=True)
    jax.block_until_ready(out_split)
    assert jnp.allclose(out_split, ref, atol=1e-5, rtol=1e-5)

    # 4) bf16 ingest (halved HBM bytes); compare against the reference fed the
    #    same bf16-rounded inputs, since the rounding itself perturbs results.
    out_bf16 = dash_actr_forward(w, inputs, ingest_dtype=jnp.bfloat16)
    jax.block_until_ready(out_bf16)
    ref_bf16 = dash_actr_reference(w, inputs.astype(jnp.bfloat16).astype(jnp.float32))
    assert jnp.allclose(out_bf16, ref_bf16, atol=5e-4, rtol=5e-4)

    print("KERNEL_OK")
</pallas_src>

<mosaic_0001>
module attributes {stable_mosaic.version = 11 : i64} {
  func.func @_dash_actr_kernel_packed(%arg0: i32, %arg1: i32, %arg2: memref<5xf32, #tpu.memory_space<smem>>, %arg3: memref<32x768xf32, #tpu.memory_space<vmem>>, %arg4: memref<1x768xf32, #tpu.memory_space<vmem>>, %arg5: memref<8x768xf32, #tpu.memory_space<vmem>>) attributes {dimension_semantics = [#tpu.dimension_semantics<parallel>, #tpu.dimension_semantics<arbitrary>], iteration_bounds = array<i64: 1, 1>, scalar_prefetch = 0 : i64, scratch_operands = 1 : i64, tpu.core_type = #tpu.core_type<tc>, window_params = [{transform_indices = @transform_0, window_bounds = array<i64: 5>}, {transform_indices = @transform_1, window_bounds = array<i64: 32, 768>}, {transform_indices = @transform_2, window_bounds = array<i64: 1, 768>}]} {
    %c0 = arith.constant 0 : index
    %c0_0 = arith.constant 0 : index
    %0 = vector.load %arg3[%c0, %c0_0] : memref<32x768xf32, #tpu.memory_space<vmem>>, vector<32x768xf32>
    %c1_i32 = arith.constant 1 : i32
    %1 = tpu.dynamic_rotate %0 by %c1_i32 dim 1 : vector<32x768xf32>, i32 -> vector<32x768xf32>
    %c0_i32 = arith.constant 0 : i32
    %2 = arith.cmpi eq, %arg1, %c0_i32 : i32
    %3 = arith.extui %2 : i1 to i32
    %c0_i32_1 = arith.constant 0 : i32
    %4 = arith.cmpi ne, %3, %c0_i32_1 : i32
    scf.if %4 {
      %cst_11 = arith.constant 0.000000e+00 : f32
      %36 = vector.broadcast %cst_11 : f32 to vector<8x768xf32>
      %c0_12 = arith.constant 0 : index
      %c0_13 = arith.constant 0 : index
      %37 = vector.load %arg5[%c0_12, %c0_13] : memref<8x768xf32, #tpu.memory_space<vmem>>, vector<8x768xf32>
      tpu.vector_store %arg5[%c0_12, %c0_13], %36 {strides = array<i32>} : memref<8x768xf32, #tpu.memory_space<vmem>>, vector<8x768xf32>,
    } else {
    }
    %c1 = arith.constant 1 : index
    %5 = memref.load %arg2[%c1] : memref<5xf32, #tpu.memory_space<smem>>
    %cst = arith.constant 0.000000e+00 : f32
    %6 = arith.subf %cst, %5 : f32
    %c2 = arith.constant 2 : index
    %7 = memref.load %arg2[%c2] : memref<5xf32, #tpu.memory_space<smem>>
    %c3 = arith.constant 3 : index
    %8 = memref.load %arg2[%c3] : memref<5xf32, #tpu.memory_space<smem>>
    %cst_2 = arith.constant 1.000000e-01 : f32
    %9 = vector.broadcast %cst_2 : f32 to vector<32x768xf32>
    %10 = arith.cmpf ogt, %0, %9 : vector<32x768xf32>
    %11 = math.log %0 : vector<32x768xf32>
    %12 = vector.broadcast %6 : f32 to vector<32x768xf32>
    %13 = arith.mulf %12, %11 : vector<32x768xf32>
    %14 = math.exp %13 : vector<32x768xf32>
    %cst_3 = arith.constant 0.000000e+00 : f32
    %15 = vector.broadcast %cst_3 : f32 to vector<32x768xf32>
    %16 = arith.select %10, %14, %15 : vector<32x768xi1>, vector<32x768xf32>
    %cst_4 = arith.constant 0.000000e+00 : f32
    %17 = vector.broadcast %cst_4 : f32 to vector<32x768xf32>
    %18 = arith.cmpf oeq, %1, %17 : vector<32x768xf32>
    %19 = vector.broadcast %7 : f32 to vector<32x768xf32>
    %20 = vector.broadcast %8 : f32 to vector<32x768xf32>
    %21 = arith.select %18, %19, %20 : vector<32x768xi1>, vector<32x768xf32>
    %22 = arith.mulf %16, %21 : vector<32x768xf32>
    %23 = vector.extract_strided_slice %22 {offsets = [0, 0], sizes = [8, 768], strides = [1, 1]} : vector<32x768xf32> to vector<8x768xf32>
    %24 = vector.extract_strided_slice %22 {offsets = [8, 0], sizes = [8, 768], strides = [1, 1]} : vector<32x768xf32> to vector<8x768xf32>
    %25 = arith.addf %23, %24 : vector<8x768xf32>
    %26 = vector.extract_strided_slice %22 {offsets = [16, 0], sizes = [8, 768], strides = [1, 1]} : vector<32x768xf32> to vector<8x768xf32>
    %27 = arith.addf %25, %26 : vector<8x768xf32>
    %28 = vector.extract_strided_slice %22 {offsets = [24, 0], sizes = [8, 768], strides = [1, 1]} : vector<32x768xf32> to vector<8x768xf32>
    %29 = arith.addf %27, %28 : vector<8x768xf32>
    %c0_5 = arith.constant 0 : index
    %c0_6 = arith.constant 0 : index
    %30 = vector.load %arg5[%c0_5, %c0_6] : memref<8x768xf32, #tpu.memory_space<vmem>>, vector<8x768xf32>
    %31 = arith.addf %30, %29 : vector<8x768xf32>
    %c0_7 = arith.constant 0 : index
    %c0_8 = arith.constant 0 : index
    %32 = vector.load %arg5[%c0_7, %c0_8] : memref<8x768xf32, #tpu.memory_space<vmem>>, vector<8x768xf32>
    tpu.vector_store %arg5[%c0_7, %c0_8], %31 {strides = array<i32>} : memref<8x768xf32, #tpu.memory_space<vmem>>, vector<8x768xf32>,
    %c0_i32_9 = arith.constant 0 : i32
    %33 = arith.cmpi eq, %arg1, %c0_i32_9 : i32
    %34 = arith.extui %33 : i1 to i32
    %c0_i32_10 = arith.constant 0 : i32
    %35 = arith.cmpi ne, %34, %c0_i32_10 : i32
    scf.if %35 {
      %c0_11 = arith.constant 0 : index
      %c0_12 = arith.constant 0 : index
      %36 = vector.load %arg5[%c0_11, %c0_12] : memref<8x768xf32, #tpu.memory_space<vmem>>, vector<8x768xf32>
      %cst_13 = arith.constant dense<0.000000e+00> : vector<768xf32>
      %37 = vector.multi_reduction <add>, %36, %cst_13 [0] : vector<8x768xf32> to vector<768xf32>
      %38 = vector.shape_cast %37 : vector<768xf32> to vector<1x768xf32>
      %cst_14 = arith.constant 0.000000e+00 : f32
      %39 = vector.broadcast %cst_14 : f32 to vector<1x768xf32>
      %40 = arith.maximumf %38, %39 : vector<1x768xf32>
      %c0_15 = arith.constant 0 : index
      %41 = memref.load %arg2[%c0_15] : memref<5xf32, #tpu.memory_space<smem>>
      %cst_16 = arith.constant 1.000000e+00 : f32
      %42 = vector.broadcast %cst_16 : f32 to vector<1x768xf32>
      %43 = arith.addf %42, %40 : vector<1x768xf32>
      %44 = math.log %43 : vector<1x768xf32>
      %45 = vector.broadcast %41 : f32 to vector<1x768xf32>
      %46 = arith.mulf %45, %44 : vector<1x768xf32>
      %c4 = arith.constant 4 : index
      %47 = memref.load %arg2[%c4] : memref<5xf32, #tpu.memory_space<smem>>
      %48 = vector.broadcast %47 : f32 to vector<1x768xf32>
      %49 = arith.addf %46, %48 : vector<1x768xf32>
      %50 = arith.negf %49 : vector<1x768xf32>
      %51 = math.exp %50 : vector<1x768xf32>
      %cst_17 = arith.constant 1.000000e+00 : f32
      %52 = vector.broadcast %cst_17 : f32 to vector<1x768xf32>
      %53 = arith.addf %52, %51 : vector<1x768xf32>
      %54 = arith.divf %52, %53 : vector<1x768xf32>
      %c0_18 = arith.constant 0 : index
      %c0_19 = arith.constant 0 : index
      %55 = vector.load %arg4[%c0_18, %c0_19] : memref<1x768xf32, #tpu.memory_space<vmem>>, vector<1x768xf32>
      tpu.vector_store %arg4[%c0_18, %c0_19], %54 {strides = array<i32>} : memref<1x768xf32, #tpu.memory_space<vmem>>, vector<1x768xf32>,
    } else {
    }
    return
  }
  func.func @transform_0(%arg0: i32, %arg1: i32) -> i32 {
    %c0_i32 = arith.constant 0 : i32
    %c0_i32_0 = arith.constant 0 : i32
    return %c0_i32 : i32
  }
  func.func @transform_1(%arg0: i32, %arg1: i32) -> (i32, i32) {
    %c0_i32 = arith.constant 0 : i32
    return %arg1, %arg0 : i32, i32
  }
  func.func @transform_2(%arg0: i32, %arg1: i32) -> (i32, i32) {
    %c0_i32 = arith.constant 0 : i32
    %c0_i32_0 = arith.constant 0 : i32
    return %c0_i32, %arg0 : i32, i32
  }
}

</mosaic_0001>

<llo_original>
// kernel: tpu_custom_call.1
$region0: #{tpu_custom_call.1}
  #allocation0 [shape = 'u32[]', space=smem, size = 0x4, offset = 0x4, fixed_abs, tag = 'smem constant byte address 0x4 - core index']
  #allocation1 [shape = 'u32[144,128]{1,0:T(1,128)}', space=vmem, size = 0x12000, scoped, tag = 'internal scratch']
  #allocation2 [shape = 'f32[8,768]{1,0:T(8,128)}', space=vmem, size = 0x6000, scoped, tag = 'scratch operand']
  %s0 = inlined_call_operand.hbm [shape: f32[5], index: 0, kind: input, shape index: {}]
  %s1 = inlined_call_operand.hbm [shape: f32[32,768], index: 1, kind: input, shape index: {}]
  %s2 = inlined_call_operand.hbm [shape: f32[1,768], index: 2, kind: output, shape index: {}]
  %s3 = sld [smem:[#allocation0]]
  $region34: #{tpu_custom_call.1} parent=0
    _
  %s5 = ssub.s32 1, %s3
  %s6 = scalar_select 0, %s5, %s3
  $region1: #{tpu_custom_call.1} parent=0
    #allocation3 [shape = 'u8[512]{0}', space=smem, size = 0x200, scoped, tag = 'input window, operand 0, single buffered']
    #allocation4 [shape = 's32[1]{0}', space=sflag, size = 0x4, scoped, tag = 'scoped memory for tpu_custom_call.1']
    #allocation5 [shape = 's32[1]{0}', space=sflag, size = 0x4, scoped, tag = 'scoped memory for tpu_custom_call.1']
    #allocation6 [shape = 's32[1]{0}', space=sflag, size = 0x4, scoped, tag = 'scoped memory for tpu_custom_call.1']
    #allocation7 [shape = 'u8[98304]{0}', space=vmem, size = 0x18000, scoped, tag = 'input window, operand 1, single buffered']
    #allocation8 [shape = 'u8[3072]{0}', space=vmem, size = 0xc00, scoped, tag = 'output window, operand 0, single buffered']
    %7 = vsyncpa [#allocation6], 0
    %8 = vsyncpa [#allocation4], 0
    %9 = vsyncpa [#allocation5], 0
    // Predicated region
    $region2: #{tpu_custom_call.1} parent=1 // pred_check
      _
    $region3: #{tpu_custom_call.1} parent=1 // pred_check_branch
      %11 = sbr.rel (0) target = $region5
    $region4: #{tpu_custom_call.1} parent=1 // pred_region
      %s13 = ssub.s32 16, 16
      %14 = vsyncadd [#allocation6], %s13
      %17 = dma.hbm_to_smem %s0, 16, [#allocation3], [#allocation6]
    $region5: #{tpu_custom_call.1} parent=1 // pred_fallthru
      _
    // Predicated region
    $region6: #{tpu_custom_call.1} parent=1 // pred_check
      _
    $region7: #{tpu_custom_call.1} parent=1 // pred_check_branch
      %19 = sbr.rel (0) target = $region9
    $region8: #{tpu_custom_call.1} parent=1 // pred_region
      %s21 = ssub.s32 3072, 3072
      %22 = vsyncadd [#allocation4], %s21
      %s23 = sshll.u32 [#allocation7], 4
      %s24 = int_to_ptr.vmem [resolvable:$true] %s23
      %29 = dma.hbm_to_vmem [thread:$0]  %s1, 3072, %s24, [#allocation4], 768, 768, 48
    $region9: #{tpu_custom_call.1} parent=1 // pred_fallthru
      _
    // Predicated region
    $region10: #{tpu_custom_call.1} parent=1 // pred_check
      _
    $region11: #{tpu_custom_call.1} parent=1 // pred_check_branch
      %31 = sbr.rel (0) target = $region13
    $region12: #{tpu_custom_call.1} parent=1 // pred_region
      %32 = dma.done [#allocation6], 16
    $region13: #{tpu_custom_call.1} parent=1 // pred_fallthru
      _
    // Predicated region
    $region14: #{tpu_custom_call.1} parent=1 // pred_check
      _
    $region15: #{tpu_custom_call.1} parent=1 // pred_check_branch
      %34 = sbr.rel (0) target = $region17
    $region16: #{tpu_custom_call.1} parent=1 // pred_region
      %35 = dma.done [#allocation4], 3072
    $region17: #{tpu_custom_call.1} parent=1 // pred_fallthru
      _
    %36 = sfence
    %v37 = vld [vmem:[#allocation7] sm:$0xff]
    %v38 = vld [vmem:[#allocation7 + $0x8] sm:$0xff]
    %v39 = vld [vmem:[#allocation7 + $0x10] sm:$0xff]
    %v40 = vld [vmem:[#allocation7 + $0x18] sm:$0xff]
    %v41 = vld [vmem:[#allocation7 + $0x20] sm:$0xff]
    %v42 = vld [vmem:[#allocation7 + $0x28] sm:$0xff]
    %v43 = vld [vmem:[#allocation7 + $0x30] sm:$0xff]
    %v44 = vld [vmem:[#allocation7 + $0x38] sm:$0xff]
    %v45 = vld [vmem:[#allocation7 + $0x40] sm:$0xff]
    %v46 = vld [vmem:[#allocation7 + $0x48] sm:$0xff]
    %v47 = vld [vmem:[#allocation7 + $0x50] sm:$0xff]
    %v48 = vld [vmem:[#allocation7 + $0x58] sm:$0xff]
    %v49 = vld [vmem:[#allocation7 + $0x60] sm:$0xff]
    %v50 = vld [vmem:[#allocation7 + $0x68] sm:$0xff]
    %v51 = vld [vmem:[#allocation7 + $0x70] sm:$0xff]
    %v52 = vld [vmem:[#allocation7 + $0x78] sm:$0xff]
    %v53 = vld [vmem:[#allocation7 + $0x80] sm:$0xff]
    %v54 = vld [vmem:[#allocation7 + $0x88] sm:$0xff]
    %v55 = vld [vmem:[#allocation7 + $0x90] sm:$0xff]
    %v56 = vld [vmem:[#allocation7 + $0x98] sm:$0xff]
    %v57 = vld [vmem:[#allocation7 + $0xa0] sm:$0xff]
    %v58 = vld [vmem:[#allocation7 + $0xa8] sm:$0xff]
    %v59 = vld [vmem:[#allocation7 + $0xb0] sm:$0xff]
    %v60 = vld [vmem:[#allocation7 + $0xb8] sm:$0xff]
    %61 = vrot.lane.b32.xlu0 %v37, 1
    %v62 = vpop.permute.xlu0 %61
    %63 = vrot.lane.b32.xlu0 %v43, 1
    %v64 = vpop.permute.xlu0 %63
    %65 = vrot.lane.b32.xlu0 %v49, 1
    %v66 = vpop.permute.xlu0 %65
    %67 = vrot.lane.b32.xlu0 %v55, 1
    %v68 = vpop.permute.xlu0 %67
    %69 = vrot.lane.b32.xlu0 %v38, 1
    %v70 = vpop.permute.xlu0 %69
    %71 = vrot.lane.b32.xlu0 %v44, 1
    %v72 = vpop.permute.xlu0 %71
    %73 = vrot.lane.b32.xlu0 %v50, 1
    %v74 = vpop.permute.xlu0 %73
    %75 = vrot.lane.b32.xlu0 %v56, 1
    %v76 = vpop.permute.xlu0 %75
    %77 = vrot.lane.b32.xlu0 %v39, 1
    %v78 = vpop.permute.xlu0 %77
    %79 = vrot.lane.b32.xlu0 %v45, 1
    %v80 = vpop.permute.xlu0 %79
    %81 = vrot.lane.b32.xlu0 %v51, 1
    %v82 = vpop.permute.xlu0 %81
    %83 = vrot.lane.b32.xlu0 %v57, 1
    %v84 = vpop.permute.xlu0 %83
    %85 = vrot.lane.b32.xlu0 %v40, 1
    %v86 = vpop.permute.xlu0 %85
    %87 = vrot.lane.b32.xlu0 %v46, 1
    %v88 = vpop.permute.xlu0 %87
    %89 = vrot.lane.b32.xlu0 %v52, 1
    %v90 = vpop.permute.xlu0 %89
    %91 = vrot.lane.b32.xlu0 %v58, 1
    %v92 = vpop.permute.xlu0 %91
    %93 = vrot.lane.b32.xlu0 %v41, 1
    %v94 = vpop.permute.xlu0 %93
    %95 = vrot.lane.b32.xlu0 %v47, 1
    %v96 = vpop.permute.xlu0 %95
    %97 = vrot.lane.b32.xlu0 %v53, 1
    %v98 = vpop.permute.xlu0 %97
    %99 = vrot.lane.b32.xlu0 %v59, 1
    %v100 = vpop.permute.xlu0 %99
    %101 = vrot.lane.b32.xlu0 %v42, 1
    %v102 = vpop.permute.xlu0 %101
    %103 = vrot.lane.b32.xlu0 %v48, 1
    %v104 = vpop.permute.xlu0 %103
    %105 = vrot.lane.b32.xlu0 %v54, 1
    %v106 = vpop.permute.xlu0 %105
    %107 = vrot.lane.b32.xlu0 %v60, 1
    %v108 = vpop.permute.xlu0 %107
    %v109 = vlaneseq
    %v110 = vand.u32 %v109, 127
    %vm111 = vcmp.lt.s32.totalorder %v110, 1
    %v112 = vsel %vm111, %v94, %v102
    %v113 = vsel %vm111, %v96, %v104
    %v114 = vsel %vm111, %v98, %v106
    %v115 = vsel %vm111, %v100, %v108
    %v116 = vsel %vm111, %v86, %v94
    %v117 = vsel %vm111, %v88, %v96
    %v118 = vsel %vm111, %v90, %v98
    %v119 = vsel %vm111, %v92, %v100
    %v120 = vsel %vm111, %v78, %v86
    %v121 = vsel %vm111, %v80, %v88
    %v122 = vsel %vm111, %v82, %v90
    %v123 = vsel %vm111, %v84, %v92
    %v124 = vsel %vm111, %v70, %v78
    %v125 = vsel %vm111, %v72, %v80
    %v126 = vsel %vm111, %v74, %v82
    %v127 = vsel %vm111, %v76, %v84
    %v128 = vsel %vm111, %v62, %v70
    %v129 = vsel %vm111, %v64, %v72
    %v130 = vsel %vm111, %v66, %v74
    %v131 = vsel %vm111, %v68, %v76
    %v132 = vsel %vm111, %v102, %v62
    %v133 = vsel %vm111, %v104, %v64
    %v134 = vsel %vm111, %v106, %v66
    %v135 = vsel %vm111, %v108, %v68
    %p136 = scmp.eq.s32.totalorder 0, 0
    // Predicated region
    $region18: #{tpu_custom_call.1} parent=1 // pred_check
      %p137 = pneg %p136
    $region19: #{tpu_custom_call.1} parent=1 // pred_check_branch
      %139 = sbr.rel (%p137) target = $region21
    $region20: #{tpu_custom_call.1} parent=1 // pred_region
      %140 = vst [vmem:[#allocation2] sm:$0xff] 0.0
      %141 = vst [vmem:[#allocation2 + $0x8] sm:$0xff] 0.0
      %142 = vst [vmem:[#allocation2 + $0x10] sm:$0xff] 0.0
      %143 = vst [vmem:[#allocation2 + $0x18] sm:$0xff] 0.0
      %144 = vst [vmem:[#allocation2 + $0x20] sm:$0xff] 0.0
      %145 = vst [vmem:[#allocation2 + $0x28] sm:$0xff] 0.0
    $region21: #{tpu_custom_call.1} parent=1 // pred_fallthru
      _
    %s146 = sld [smem:[#allocation3 + $0x1]]
    %s147 = ssub.f32 0.0, %s146
    %s148 = sld [smem:[#allocation3 + $0x2]]
    %s149 = sld [smem:[#allocation3 + $0x3]]
    %vm150 = vcmp.gt.f32.partialorder %v37, 0.1
    %vm151 = vcmp.gt.f32.partialorder %v38, 0.1
    %vm152 = vcmp.gt.f32.partialorder %v39, 0.1
    %vm153 = vcmp.gt.f32.partialorder %v40, 0.1
    %vm154 = vcmp.gt.f32.partialorder %v41, 0.1
    %vm155 = vcmp.gt.f32.partialorder %v42, 0.1
    %vm156 = vcmp.gt.f32.partialorder %v43, 0.1
    %vm157 = vcmp.gt.f32.partialorder %v44, 0.1
    %vm158 = vcmp.gt.f32.partialorder %v45, 0.1
    %vm159 = vcmp.gt.f32.partialorder %v46, 0.1
    %vm160 = vcmp.gt.f32.partialorder %v47, 0.1
    %vm161 = vcmp.gt.f32.partialorder %v48, 0.1
    %vm162 = vcmp.gt.f32.partialorder %v49, 0.1
    %vm163 = vcmp.gt.f32.partialorder %v50, 0.1
    %vm164 = vcmp.gt.f32.partialorder %v51, 0.1
    %vm165 = vcmp.gt.f32.partialorder %v52, 0.1
    %vm166 = vcmp.gt.f32.partialorder %v53, 0.1
    %vm167 = vcmp.gt.f32.partialorder %v54, 0.1
    %vm168 = vcmp.gt.f32.partialorder %v55, 0.1
    %vm169 = vcmp.gt.f32.partialorder %v56, 0.1
    %vm170 = vcmp.gt.f32.partialorder %v57, 0.1
    %vm171 = vcmp.gt.f32.partialorder %v58, 0.1
    %vm172 = vcmp.gt.f32.partialorder %v59, 0.1
    %vm173 = vcmp.gt.f32.partialorder %v60, 0.1
    %v174 = vlog2.pop %v37
    %v175 = vmul.f32 %v174, 0.6931472
    %v176 = vlog2.pop %v38
    %v177 = vmul.f32 %v176, 0.6931472
    %v178 = vlog2.pop %v39
    %v179 = vmul.f32 %v178, 0.6931472
    %v180 = vlog2.pop %v40
    %v181 = vmul.f32 %v180, 0.6931472
    %v182 = vlog2.pop %v41
    %v183 = vmul.f32 %v182, 0.6931472
    %v184 = vlog2.pop %v42
    %v185 = vmul.f32 %v184, 0.6931472
    %v186 = vlog2.pop %v43
    %v187 = vmul.f32 %v186, 0.6931472
    %v188 = vlog2.pop %v44
    %v189 = vmul.f32 %v188, 0.6931472
    %v190 = vlog2.pop %v45
    %v191 = vmul.f32 %v190, 0.6931472
    %v192 = vlog2.pop %v46
    %v193 = vmul.f32 %v192, 0.6931472
    %v194 = vlog2.pop %v47
    %v195 = vmul.f32 %v194, 0.6931472
    %v196 = vlog2.pop %v48
    %v197 = vmul.f32 %v196, 0.6931472
    %v198 = vlog2.pop %v49
    %v199 = vmul.f32 %v198, 0.6931472
    %v200 = vlog2.pop %v50
    %v201 = vmul.f32 %v200, 0.6931472
    %v202 = vlog2.pop %v51
    %v203 = vmul.f32 %v202, 0.6931472
    %v204 = vlog2.pop %v52
    %v205 = vmul.f32 %v204, 0.6931472
    %v206 = vlog2.pop %v53
    %v207 = vmul.f32 %v206, 0.6931472
    %v208 = vlog2.pop %v54
    %v209 = vmul.f32 %v208, 0.6931472
    %v210 = vlog2.pop %v55
    %v211 = vmul.f32 %v210, 0.6931472
    %v212 = vlog2.pop %v56
    %v213 = vmul.f32 %v212, 0.6931472
    %v214 = vlog2.pop %v57
    %v215 = vmul.f32 %v214, 0.6931472
    %v216 = vlog2.pop %v58
    %v217 = vmul.f32 %v216, 0.6931472
    %v218 = vlog2.pop %v59
    %v219 = vmul.f32 %v218, 0.6931472
    %v220 = vlog2.pop %v60
    %v221 = vmul.f32 %v220, 0.6931472
    %v222 = vstv %s147
    %v223 = vmul.f32 %v222, %v175
    %v224 = vmul.f32 %v222, %v177
    %v225 = vmul.f32 %v222, %v179
    %v226 = vmul.f32 %v222, %v181
    %v227 = vmul.f32 %v222, %v183
    %v228 = vmul.f32 %v222, %v185
    %v229 = vmul.f32 %v222, %v187
    %v230 = vmul.f32 %v222, %v189
    %v231 = vmul.f32 %v222, %v191
    %v232 = vmul.f32 %v222, %v193
    %v233 = vmul.f32 %v222, %v195
    %v234 = vmul.f32 %v222, %v197
    %v235 = vmul.f32 %v222, %v199
    %v236 = vmul.f32 %v222, %v201
    %v237 = vmul.f32 %v222, %v203
    %v238 = vmul.f32 %v222, %v205
    %v239 = vmul.f32 %v222, %v207
    %v240 = vmul.f32 %v222, %v209
    %v241 = vmul.f32 %v222, %v211
    %v242 = vmul.f32 %v222, %v213
    %v243 = vmul.f32 %v222, %v215
    %v244 = vmul.f32 %v222, %v217
    %v245 = vmul.f32 %v222, %v219
    %v246 = vmul.f32 %v222, %v221
    %v247 = vmul.f32 %v223, 1.442695
    %v248 = vpow.pop %v247
    %v249 = vmul.f32 %v224, 1.442695
    %v250 = vpow.pop %v249
    %v251 = vmul.f32 %v225, 1.442695
    %v252 = vpow.pop %v251
    %v253 = vmul.f32 %v226, 1.442695
    %v254 = vpow.pop %v253
    %v255 = vmul.f32 %v227, 1.442695
    %v256 = vpow.pop %v255
    %v257 = vmul.f32 %v228, 1.442695
    %v258 = vpow.pop %v257
    %v259 = vmul.f32 %v229, 1.442695
    %v260 = vpow.pop %v259
    %v261 = vmul.f32 %v230, 1.442695
    %v262 = vpow.pop %v261
    %v263 = vmul.f32 %v231, 1.442695
    %v264 = vpow.pop %v263
    %v265 = vmul.f32 %v232, 1.442695
    %v266 = vpow.pop %v265
    %v267 = vmul.f32 %v233, 1.442695
    %v268 = vpow.pop %v267
    %v269 = vmul.f32 %v234, 1.442695
    %v270 = vpow.pop %v269
    %v271 = vmul.f32 %v235, 1.442695
    %v272 = vpow.pop %v271
    %v273 = vmul.f32 %v236, 1.442695
    %v274 = vpow.pop %v273
    %v275 = vmul.f32 %v237, 1.442695
    %v276 = vpow.pop %v275
    %v277 = vmul.f32 %v238, 1.442695
    %v278 = vpow.pop %v277
    %v279 = vmul.f32 %v239, 1.442695
    %v280 = vpow.pop %v279
    %v281 = vmul.f32 %v240, 1.442695
    %v282 = vpow.pop %v281
    %v283 = vmul.f32 %v241, 1.442695
    %v284 = vpow.pop %v283
    %v285 = vmul.f32 %v242, 1.442695
    %v286 = vpow.pop %v285
    %v287 = vmul.f32 %v243, 1.442695
    %v288 = vpow.pop %v287
    %v289 = vmul.f32 %v244, 1.442695
    %v290 = vpow.pop %v289
    %v291 = vmul.f32 %v245, 1.442695
    %v292 = vpow.pop %v291
    %v293 = vmul.f32 %v246, 1.442695
    %v294 = vpow.pop %v293
    %v295 = vsel %vm150, %v248, 0.0
    %v296 = vsel %vm151, %v250, 0.0
    %v297 = vsel %vm152, %v252, 0.0
    %v298 = vsel %vm153, %v254, 0.0
    %v299 = vsel %vm154, %v256, 0.0
    %v300 = vsel %vm155, %v258, 0.0
    %v301 = vsel %vm156, %v260, 0.0
    %v302 = vsel %vm157, %v262, 0.0
    %v303 = vsel %vm158, %v264, 0.0
    %v304 = vsel %vm159, %v266, 0.0
    %v305 = vsel %vm160, %v268, 0.0
    %v306 = vsel %vm161, %v270, 0.0
    %v307 = vsel %vm162, %v272, 0.0
    %v308 = vsel %vm163, %v274, 0.0
    %v309 = vsel %vm164, %v276, 0.0
    %v310 = vsel %vm165, %v278, 0.0
    %v311 = vsel %vm166, %v280, 0.0
    %v312 = vsel %vm167, %v282, 0.0
    %v313 = vsel %vm168, %v284, 0.0
    %v314 = vsel %vm169, %v286, 0.0
    %v315 = vsel %vm170, %v288, 0.0
    %v316 = vsel %vm171, %v290, 0.0
    %v317 = vsel %vm172, %v292, 0.0
    %v318 = vsel %vm173, %v294, 0.0
    %vm319 = vcmp.eq.f32.partialorder %v132, 0.0
    %vm320 = vcmp.eq.f32.partialorder %v128, 0.0
    %vm321 = vcmp.eq.f32.partialorder %v124, 0.0
    %vm322 = vcmp.eq.f32.partialorder %v120, 0.0
    %vm323 = vcmp.eq.f32.partialorder %v116, 0.0
    %vm324 = vcmp.eq.f32.partialorder %v112, 0.0
    %vm325 = vcmp.eq.f32.partialorder %v133, 0.0
    %vm326 = vcmp.eq.f32.partialorder %v129, 0.0
    %vm327 = vcmp.eq.f32.partialorder %v125, 0.0
    %vm328 = vcmp.eq.f32.partialorder %v121, 0.0
    %vm329 = vcmp.eq.f32.partialorder %v117, 0.0
    %vm330 = vcmp.eq.f32.partialorder %v113, 0.0
    %vm331 = vcmp.eq.f32.partialorder %v134, 0.0
    %vm332 = vcmp.eq.f32.partialorder %v130, 0.0
    %vm333 = vcmp.eq.f32.partialorder %v126, 0.0
    %vm334 = vcmp.eq.f32.partialorder %v122, 0.0
    %vm335 = vcmp.eq.f32.partialorder %v118, 0.0
    %vm336 = vcmp.eq.f32.partialorder %v114, 0.0
    %vm337 = vcmp.eq.f32.partialorder %v135, 0.0
    %vm338 = vcmp.eq.f32.partialorder %v131, 0.0
    %vm339 = vcmp.eq.f32.partialorder %v127, 0.0
    %vm340 = vcmp.eq.f32.partialorder %v123, 0.0
    %vm341 = vcmp.eq.f32.partialorder %v119, 0.0
    %vm342 = vcmp.eq.f32.partialorder %v115, 0.0
    %v343 = vstv %s148
    %v344 = vstv %s149
    %v345 = vsel %vm319, %v343, %v344
    %v346 = vsel %vm320, %v343, %v344
    %v347 = vsel %vm321, %v343, %v344
    %v348 = vsel %vm322, %v343, %v344
    %v349 = vsel %vm323, %v343, %v344
    %v350 = vsel %vm324, %v343, %v344
    %v351 = vsel %vm325, %v343, %v344
    %v352 = vsel %vm326, %v343, %v344
    %v353 = vsel %vm327, %v343, %v344
    %v354 = vsel %vm328, %v343, %v344
    %v355 = vsel %vm329, %v343, %v344
    %v356 = vsel %vm330, %v343, %v344
    %v357 = vsel %vm331, %v343, %v344
    %v358 = vsel %vm332, %v343, %v344
    %v359 = vsel %vm333, %v343, %v344
    %v360 = vsel %vm334, %v343, %v344
    %v361 = vsel %vm335, %v343, %v344
    %v362 = vsel %vm336, %v343, %v344
    %v363 = vsel %vm337, %v343, %v344
    %v364 = vsel %vm338, %v343, %v344
    %v365 = vsel %vm339, %v343, %v344
    %v366 = vsel %vm340, %v343, %v344
    %v367 = vsel %vm341, %v343, %v344
    %v368 = vsel %vm342, %v343, %v344
    %v369 = vmul.f32 %v295, %v345
    %v370 = vmul.f32 %v296, %v346
    %v371 = vmul.f32 %v297, %v347
    %v372 = vmul.f32 %v298, %v348
    %v373 = vmul.f32 %v299, %v349
    %v374 = vmul.f32 %v300, %v350
    %v375 = vmul.f32 %v301, %v351
    %v376 = vmul.f32 %v302, %v352
    %v377 = vmul.f32 %v303, %v353
    %v378 = vmul.f32 %v304, %v354
    %v379 = vmul.f32 %v305, %v355
    %v380 = vmul.f32 %v306, %v356
    %v381 = vmul.f32 %v307, %v357
    %v382 = vmul.f32 %v308, %v358
    %v383 = vmul.f32 %v309, %v359
    %v384 = vmul.f32 %v310, %v360
    %v385 = vmul.f32 %v311, %v361
    %v386 = vmul.f32 %v312, %v362
    %v387 = vmul.f32 %v313, %v363
    %v388 = vmul.f32 %v314, %v364
    %v389 = vmul.f32 %v315, %v365
    %v390 = vmul.f32 %v316, %v366
    %v391 = vmul.f32 %v317, %v367
    %v392 = vmul.f32 %v318, %v368
    %v393 = vadd.f32 %v369, %v375
    %v394 = vadd.f32 %v370, %v376
    %v395 = vadd.f32 %v371, %v377
    %v396 = vadd.f32 %v372, %v378
    %v397 = vadd.f32 %v373, %v379
    %v398 = vadd.f32 %v374, %v380
    %v399 = vadd.f32 %v393, %v381
    %v400 = vadd.f32 %v394, %v382
    %v401 = vadd.f32 %v395, %v383
    %v402 = vadd.f32 %v396, %v384
    %v403 = vadd.f32 %v397, %v385
    %v404 = vadd.f32 %v398, %v386
    %v405 = vadd.f32 %v399, %v387
    %v406 = vadd.f32 %v400, %v388
    %v407 = vadd.f32 %v401, %v389
    %v408 = vadd.f32 %v402, %v390
    %v409 = vadd.f32 %v403, %v391
    %v410 = vadd.f32 %v404, %v392
    %v411 = vld [vmem:[#allocation2] sm:$0xff]
    %v412 = vld [vmem:[#allocation2 + $0x8] sm:$0xff]
    %v413 = vld [vmem:[#allocation2 + $0x10] sm:$0xff]
    %v414 = vld [vmem:[#allocation2 + $0x18] sm:$0xff]
    %v415 = vld [vmem:[#allocation2 + $0x20] sm:$0xff]
    %v416 = vld [vmem:[#allocation2 + $0x28] sm:$0xff]
    %v417 = vadd.f32 %v411, %v405
    %v418 = vadd.f32 %v412, %v406
    %v419 = vadd.f32 %v413, %v407
    %v420 = vadd.f32 %v414, %v408
    %v421 = vadd.f32 %v415, %v409
    %v422 = vadd.f32 %v416, %v410
    %423 = vst [vmem:[#allocation2] sm:$0xff] %v417
    %424 = vst [vmem:[#allocation2 + $0x8] sm:$0xff] %v418
    %425 = vst [vmem:[#allocation2 + $0x10] sm:$0xff] %v419
    %426 = vst [vmem:[#allocation2 + $0x18] sm:$0xff] %v420
    %427 = vst [vmem:[#allocation2 + $0x20] sm:$0xff] %v421
    %428 = vst [vmem:[#allocation2 + $0x28] sm:$0xff] %v422
    // Predicated region
    $region22: #{tpu_custom_call.1} parent=1 // pred_check
      %p429 = pneg %p136
    $region23: #{tpu_custom_call.1} parent=1 // pred_check_branch
      %431 = sbr.rel (%p429) target = $region25
    $region24: #{tpu_custom_call.1} parent=1 // pred_region
      %v432 = vld [vmem:[#allocation2] sm:$0xff]
      %v433 = vld [vmem:[#allocation2 + $0x8] sm:$0xff]
      %v434 = vld [vmem:[#allocation2 + $0x10] sm:$0xff]
      %v435 = vld [vmem:[#allocation2 + $0x18] sm:$0xff]
      %v436 = vld [vmem:[#allocation2 + $0x20] sm:$0xff]
      %v437 = vld [vmem:[#allocation2 + $0x28] sm:$0xff]
      %v438 = vrot.slane %v432, 4
      %v439 = vadd.f32 %v432, %v438
      %v440 = vrot.slane %v439, 2
      %v441 = vadd.f32 %v439, %v440
      %v442 = vrot.slane %v441, 1
      %v443 = vadd.f32 %v441, %v442
      %v444 = vrot.slane %v433, 4
      %v445 = vadd.f32 %v433, %v444
      %v446 = vrot.slane %v445, 2
      %v447 = vadd.f32 %v445, %v446
      %v448 = vrot.slane %v447, 1
      %v449 = vadd.f32 %v447, %v448
      %v450 = vrot.slane %v434, 4
      %v451 = vadd.f32 %v434, %v450
      %v452 = vrot.slane %v451, 2
      %v453 = vadd.f32 %v451, %v452
      %v454 = vrot.slane %v453, 1
      %v455 = vadd.f32 %v453, %v454
      %v456 = vrot.slane %v435, 4
      %v457 = vadd.f32 %v435, %v456
      %v458 = vrot.slane %v457, 2
      %v459 = vadd.f32 %v457, %v458
      %v460 = vrot.slane %v459, 1
      %v461 = vadd.f32 %v459, %v460
      %v462 = vrot.slane %v436, 4
      %v463 = vadd.f32 %v436, %v462
      %v464 = vrot.slane %v463, 2
      %v465 = vadd.f32 %v463, %v464
      %v466 = vrot.slane %v465, 1
      %v467 = vadd.f32 %v465, %v466
      %v468 = vrot.slane %v437, 4
      %v469 = vadd.f32 %v437, %v468
      %v470 = vrot.slane %v469, 2
      %v471 = vadd.f32 %v469, %v470
      %v472 = vrot.slane %v471, 1
      %v473 = vadd.f32 %v471, %v472
      %v474 = vmax.f32 %v443, 0.0
      %v475 = vmax.f32 %v449, 0.0
      %v476 = vmax.f32 %v455, 0.0
      %v477 = vmax.f32 %v461, 0.0
      %v478 = vmax.f32 %v467, 0.0
      %v479 = vmax.f32 %v473, 0.0
      %s480 = sld [smem:[#allocation3]]
      %v481 = vadd.f32 %v474, 1.0
      %v482 = vadd.f32 %v475, 1.0
      %v483 = vadd.f32 %v476, 1.0
      %v484 = vadd.f32 %v477, 1.0
      %v485 = vadd.f32 %v478, 1.0
      %v486 = vadd.f32 %v479, 1.0
      %v487 = vlog2.pop %v481
      %v488 = vmul.f32 %v487, 0.6931472
      %v489 = vlog2.pop %v482
      %v490 = vmul.f32 %v489, 0.6931472
      %v491 = vlog2.pop %v483
      %v492 = vmul.f32 %v491, 0.6931472
      %v493 = vlog2.pop %v484
      %v494 = vmul.f32 %v493, 0.6931472
      %v495 = vlog2.pop %v485
      %v496 = vmul.f32 %v495, 0.6931472
      %v497 = vlog2.pop %v486
      %v498 = vmul.f32 %v497, 0.6931472
      %v499 = vstv %s480
      %v500 = vmul.f32 %v499, %v488
      %v501 = vmul.f32 %v499, %v490
      %v502 = vmul.f32 %v499, %v492
      %v503 = vmul.f32 %v499, %v494
      %v504 = vmul.f32 %v499, %v496
      %v505 = vmul.f32 %v499, %v498
      %s506 = sld [smem:[#allocation3 + $0x4]]
      %v507 = vstv %s506
      %v508 = vadd.f32 %v500, %v507
      %v509 = vadd.f32 %v501, %v507
      %v510 = vadd.f32 %v502, %v507
      %v511 = vadd.f32 %v503, %v507
      %v512 = vadd.f32 %v504, %v507
      %v513 = vadd.f32 %v505, %v507
      %v514 = vxor.u32 %v508, 2147483648
      %v515 = vxor.u32 %v509, 2147483648
      %v516 = vxor.u32 %v510, 2147483648
      %v517 = vxor.u32 %v511, 2147483648
      %v518 = vxor.u32 %v512, 2147483648
      %v519 = vxor.u32 %v513, 2147483648
      %v520 = vmul.f32 %v514, 1.442695
      %v521 = vpow.pop %v520
      %v522 = vmul.f32 %v515, 1.442695
      %v523 = vpow.pop %v522
      %v524 = vmul.f32 %v516, 1.442695
      %v525 = vpow.pop %v524
      %v526 = vmul.f32 %v517, 1.442695
      %v527 = vpow.pop %v526
      %v528 = vmul.f32 %v518, 1.442695
      %v529 = vpow.pop %v528
      %v530 = vmul.f32 %v519, 1.442695
      %v531 = vpow.pop %v530
      %v532 = vadd.f32 %v521, 1.0
      %v533 = vadd.f32 %v523, 1.0
      %v534 = vadd.f32 %v525, 1.0
      %v535 = vadd.f32 %v527, 1.0
      %v536 = vadd.f32 %v529, 1.0
      %v537 = vadd.f32 %v531, 1.0
      %v538 = vrcp.pop %v532
      %v539 = vmul.f32 1.0, %v538
      %v540 = vrcp.pop %v533
      %v541 = vmul.f32 1.0, %v540
      %v542 = vrcp.pop %v534
      %v543 = vmul.f32 1.0, %v542
      %v544 = vrcp.pop %v535
      %v545 = vmul.f32 1.0, %v544
      %v546 = vrcp.pop %v536
      %v547 = vmul.f32 1.0, %v546
      %v548 = vrcp.pop %v537
      %v549 = vmul.f32 1.0, %v548
      %v556 = vcombine.low %v539, %v541
      %v557 = vcombine.low %v543, %v545
      %v558 = vcombine.low %v547, %v549
      %v560 = vunpack.c.l.s4 1966171168
      %v561 = vunpack.c.0.s8 %v560
      %v562 = vlaneseq
      %v563 = vshrl.u32 %v562, 7
      %v564 = vsub.s32 %v561, %v563
      %v565 = vrot.slane %v556, %v564
      %v567 = vunpack.c.l.s4 1966171168
      %v568 = vunpack.c.0.s8 %v567
      %v569 = vlaneseq
      %v570 = vshrl.u32 %v569, 7
      %v571 = vsub.s32 %v568, %v570
      %v572 = vrot.slane %v557, %v571
      %v574 = vunpack.c.l.s4 1966171168
      %v575 = vunpack.c.0.s8 %v574
      %v576 = vlaneseq
      %v577 = vshrl.u32 %v576, 7
      %v578 = vsub.s32 %v575, %v577
      %v579 = vrot.slane %v558, %v578
      %v580 = vcombine.low %v565, %v572
      %v582 = vunpack.c.l.s4 1966171168
      %v583 = vunpack.c.0.s8 %v582
      %v584 = vlaneseq
      %v585 = vshrl.u32 %v584, 7
      %v586 = vsub.s32 %v583, %v585
      %v587 = vrot.slane %v580, %v586
      %v589 = vunpack.c.l.s4 1966171168
      %v590 = vunpack.c.0.s8 %v589
      %v591 = vlaneseq
      %v592 = vshrl.u32 %v591, 7
      %v593 = vsub.s32 %v590, %v592
      %v594 = vrot.slane %v579, %v593
      %v595 = vcombine.low %v587, %v594
      %v597 = vlaneseq
      %vm598 = vcmp.ge.s32.totalorder %v597, 0
      %vm599 = vcmp.lt.s32.totalorder %v597, 768
      %vm600 = vmand %vm598, %vm599
      %601 = vst.msk [vmem:[#allocation8] sm:$0x3f] %vm600, %v595
    $region25: #{tpu_custom_call.1} parent=1 // pred_fallthru
      _
    // Predicated region
    $region26: #{tpu_custom_call.1} parent=1 // pred_check
      _
    $region27: #{tpu_custom_call.1} parent=1 // pred_check_branch
      %603 = sbr.rel (0) target = $region29
    $region28: #{tpu_custom_call.1} parent=1 // pred_region
      %s605 = ssub.s32 96, 96
      %606 = vsyncadd [#allocation5], %s605
      %s608 = sshll.u32 [#allocation8], 4
      %s609 = int_to_ptr.vmem [resolvable:$true] %s608
      %611 = dma.vmem_to_hbm [thread:$0]  %s609, 96, %s2, [#allocation5]
    $region29: #{tpu_custom_call.1} parent=1 // pred_fallthru
      _
    // Predicated region
    $region30: #{tpu_custom_call.1} parent=1 // pred_check
      _
    $region31: #{tpu_custom_call.1} parent=1 // pred_check_branch
      %613 = sbr.rel (0) target = $region33
    $region32: #{tpu_custom_call.1} parent=1 // pred_region
      %614 = dma.done [#allocation5], 96
    $region33: #{tpu_custom_call.1} parent=1 // pred_fallthru
      _
    %615 = vsyncpa [#allocation4], 1
    %616 = vsyncpa [#allocation5], 1
    %617 = vsyncpa [#allocation6], 1

</llo_original>
